<compile_context>
chip_gen: v7x
topology: tpu7x:2x2x1
jax: 0.10.0
libtpu: 0.0.40
codegen_flags: <defaults>
</compile_context>

<pallas_src>
import functools
from enum import Enum

import jax
import jax.numpy as jnp
from jax.experimental import pallas as pl
from jax.experimental.pallas import tpu as pltpu


class GemmDtype(Enum):
    FP16 = 0
    W4A16_GPTQ = 1


_VMEM_LIMIT = 32 * 1024 * 1024   # safe on v5e/v6e/v7x, >> our ~10 MiB tiles


# ------------------------------ helpers -------------------------------------


def _round_up(a, b):
    return (a + b - 1) // b * b


def _pick_tile(dim, candidates, prefer_multi=False):
    """Largest candidate dividing `dim`; prefer >=2 blocks when asked."""
    divisors = [c for c in candidates if dim >= c and dim % c == 0]
    if prefer_multi:
        for c in divisors:
            if dim // c >= 2:
                return c
    return divisors[0] if divisors else dim


def _pick_tk_w4(K, blocksize, cands=(2048, 1024, 512, 256, 128, 64)):
    """Largest K-tile satisfying the W4 repack/layout constraints."""
    G = K // blocksize
    for tk in cands:
        if tk > K or K % tk or tk % 64 or tk % blocksize:
            continue
        tk8 = tk // 8
        if not (tk8 % blocksize == 0 or blocksize % tk8 == 0):
            continue
        gpt = tk // blocksize
        if gpt % 8 and gpt != G:
            continue
        return tk
    return K   # single K tile (block equals full dim -> alignment-exempt)


def repack_gptq_qweight(qweight, tk):
    """One-shot (load-time) nibble de-interleave of the GPTQ packing.

    Input : [K//8, N] int32; nibble i of packed row r holds W[8*r + i, n].
    Output: [K//8, N] int32; within each K-tile of `tk` rows (tk//8 packed
            rows), nibble i of packed row r holds W[base + i*(tk//8) + r, n],
            i.e. each nibble plane owns a contiguous K-stripe so the in-kernel
            unpack needs no interleave/concatenation.
    """
    K8, N = qweight.shape
    K = K8 * 8
    tk8 = tk // 8
    q = jax.lax.bitcast_convert_type(qweight, jnp.uint32)
    shifts = (4 * jnp.arange(8, dtype=jnp.uint32)).reshape(1, 8, 1)
    nib = (q[:, None, :] >> shifts) & jnp.uint32(0xF)        # [K8, 8, N]
    w = nib.reshape(K, N)                                    # W[k, n] in 0..15
    w = w.reshape(K // tk, 8, tk8, N)                        # [tile, stripe, r, n]
    packed = jnp.zeros((K // tk, tk8, N), jnp.uint32)
    for i in range(8):
        packed = packed | (w[:, i] << jnp.uint32(4 * i))
    return jax.lax.bitcast_convert_type(packed.reshape(K8, N), jnp.int32)


# ----------------------------- Pallas kernels -------------------------------


def _fp16_kernel(x_ref, w_ref, *rest, has_bias):
    if has_bias:
        b_ref, o_ref, acc_ref = rest
    else:
        o_ref, acc_ref = rest
        b_ref = None
    k = pl.program_id(2)

    @pl.when(k == 0)
    def _():
        acc_ref[...] = jnp.zeros_like(acc_ref)

    acc_ref[...] += jnp.dot(x_ref[...], w_ref[...],
                            preferred_element_type=jnp.float32)

    @pl.when(k == pl.num_programs(2) - 1)
    def _():
        out = acc_ref[...]
        if has_bias:
            out = out + b_ref[...]
        o_ref[...] = out.astype(o_ref.dtype)


def _w4a16_kernel(x_ref, qw_ref, s_ref, xg_ref, sz_ref, *rest,
                  blocksize, has_bias):
    # x_ref  : [tm, tk]    bf16  activations
    # qw_ref : [tk//8, tn] int32 repacked int4 weights (contiguous K-stripes)
    # s_ref  : [gpt, tn]   f32   per-group scales covering this K tile
    # xg_ref : [tm, G]     f32   per-group rowsums of x (zero-point term)
    # sz_ref : [G, tn]     f32   scale * zero per group
    if has_bias:
        b_ref, o_ref, acc_ref, deq_ref = rest
    else:
        o_ref, acc_ref, deq_ref = rest
        b_ref = None
    k = pl.program_id(2)

    @pl.when(k == 0)
    def _():
        acc_ref[...] = jnp.zeros_like(acc_ref)

    q = qw_ref[...]                                    # [tk8, tn] int32
    s = s_ref[...]                                     # [gpt, tn] f32
    tk8 = q.shape[0]
    # Dequantize the 8 nibble stripes (scale applied at the weight level) into
    # one [tk, tn] bf16 scratch, then a single deep-contraction MXU matmul.
    for i in range(8):
        wq = ((q >> (4 * i)) & 0xF).astype(jnp.float32)        # exact 0..15
        if tk8 <= blocksize:
            g = (i * tk8) // blocksize                          # 1 group/stripe
            deq_ref[i * tk8:(i + 1) * tk8, :] = (
                wq * s[g:g + 1, :]).astype(jnp.bfloat16)
        else:
            gps = tk8 // blocksize                              # groups/stripe
            for r in range(gps):
                lo = r * blocksize
                deq_ref[i * tk8 + lo:i * tk8 + lo + blocksize, :] = (
                    wq[lo:lo + blocksize, :]
                    * s[i * gps + r:i * gps + r + 1, :]).astype(jnp.bfloat16)

    acc_ref[...] += jnp.dot(x_ref[...], deq_ref[...],
                            preferred_element_type=jnp.float32)

    @pl.when(k == pl.num_programs(2) - 1)
    def _():
        # Hoisted zero-point correction: one depth-G matmul per output tile
        # (1/blocksize the size of the main GEMM).
        out = acc_ref[...] - jnp.dot(xg_ref[...], sz_ref[...],
                                     preferred_element_type=jnp.float32)
        if has_bias:
            out = out + b_ref[...]
        o_ref[...] = out.astype(o_ref.dtype)


# ------------------------------- wrappers ------------------------------------


def fp16_gemm(x, weight_t, bias2d, *, tm_max=512):
    """x: [M, K] bf16, weight_t: [K, N] bf16, bias2d: [1, N] f32 or None."""
    M, K = x.shape
    K2, N = weight_t.shape
    assert K == K2
    tm = min(tm_max, _round_up(M, 8))
    M_pad = _round_up(M, tm)
    if M_pad != M:
        x = jnp.pad(x, ((0, M_pad - M), (0, 0)))
    # Decode (small M): wider tn cuts per-step overhead; prefill: keep >= 2
    # blocks along a parallel axis when possible (v7x has 2 TensorCores).
    tn_cands = (1024, 512, 256, 128) if M <= 128 else (512, 256, 128)
    tn = _pick_tile(N, tn_cands, prefer_multi=True)
    tk = _pick_tile(K, (2048, 1024, 512, 256, 128, 64))
    has_bias = bias2d is not None

    in_specs = [pl.BlockSpec((tm, tk), lambda i, j, k: (i, k)),
                pl.BlockSpec((tk, tn), lambda i, j, k: (k, j))]
    args = [x, weight_t]
    if has_bias:
        in_specs.append(pl.BlockSpec((1, tn), lambda i, j, k: (0, j)))
        args.append(bias2d)

    n_i, n_j = M_pad // tm, N // tn
    bytes_accessed = (x.size * x.dtype.itemsize * n_j
                      + weight_t.size * weight_t.dtype.itemsize * n_i
                      + M_pad * N * x.dtype.itemsize
                      + (N * 4 * n_i if has_bias else 0))

    out = pl.pallas_call(
        functools.partial(_fp16_kernel, has_bias=has_bias),
        out_shape=jax.ShapeDtypeStruct((M_pad, N), x.dtype),
        grid_spec=pltpu.PrefetchScalarGridSpec(
            num_scalar_prefetch=0,
            grid=(n_i, n_j, K // tk),
            in_specs=in_specs,
            out_specs=pl.BlockSpec((tm, tn), lambda i, j, k: (i, j)),
            scratch_shapes=[pltpu.VMEM((tm, tn), jnp.float32)]),
        compiler_params=pltpu.CompilerParams(
            dimension_semantics=("parallel", "parallel", "arbitrary"),
            vmem_limit_bytes=_VMEM_LIMIT),
        cost_estimate=pl.CostEstimate(
            flops=2 * M_pad * N * K, transcendentals=0,
            bytes_accessed=int(bytes_accessed)),
    )(*args)
    return out[:M]


def w4a16_gemm(x, qweight_rp, scales_f32, szero, bias2d, blocksize, tk, *,
               tm_max=256):
    """x: [M, K] bf16; qweight_rp: [K//8, N] int32 (see repack_gptq_qweight);
    scales_f32/szero: [G, N] f32; bias2d: [1, N] f32 or None."""
    M, K = x.shape
    K8, N = qweight_rp.shape
    assert K8 * 8 == K and K % blocksize == 0 and blocksize % 8 == 0
    assert K % tk == 0 and tk % blocksize == 0 and tk % 64 == 0
    tk8 = tk // 8
    assert tk8 % blocksize == 0 or blocksize % tk8 == 0
    gpt = tk // blocksize
    G = K // blocksize
    assert gpt % 8 == 0 or gpt == G

    tm = min(tm_max, _round_up(M, 8))
    M_pad = _round_up(M, tm)
    if M_pad != M:
        x = jnp.pad(x, ((0, M_pad - M), (0, 0)))
    # x (bf16) is re-read N/tn times while the int4 weight is re-read M/tm
    # times -> favor tn ~ 2*tm; decode prefers wider tn.
    tn_cands = (1024, 512, 256, 128) if M <= 128 else (512, 256, 128)
    tn = _pick_tile(N, tn_cands, prefer_multi=True)
    has_bias = bias2d is not None

    # Per-group rowsums of x (tiny [M, G] f32): feed of the hoisted
    # zero-point-correction matmul done once per output tile in the epilogue.
    xg = jnp.sum(x.astype(jnp.float32).reshape(M_pad, G, blocksize), axis=-1)

    in_specs = [pl.BlockSpec((tm, tk), lambda i, j, k: (i, k)),
                pl.BlockSpec((tk8, tn), lambda i, j, k: (k, j)),
                pl.BlockSpec((gpt, tn), lambda i, j, k: (k, j)),
                pl.BlockSpec((tm, G), lambda i, j, k: (i, 0)),
                pl.BlockSpec((G, tn), lambda i, j, k: (0, j))]
    args = [x, qweight_rp, scales_f32, xg, szero]
    if has_bias:
        in_specs.append(pl.BlockSpec((1, tn), lambda i, j, k: (0, j)))
        args.append(bias2d)

    n_i, n_j = M_pad // tm, N // tn
    bytes_accessed = (x.size * 2 * n_j + qweight_rp.size * 4 * n_i
                      + scales_f32.size * 4 * n_i + szero.size * 4 * n_i
                      + xg.size * 4 * n_j + M_pad * N * 2
                      + (N * 4 * n_i if has_bias else 0))

    kern = functools.partial(_w4a16_kernel, blocksize=blocksize,
                             has_bias=has_bias)
    out = pl.pallas_call(
        kern,
        out_shape=jax.ShapeDtypeStruct((M_pad, N), x.dtype),
        grid_spec=pltpu.PrefetchScalarGridSpec(
            num_scalar_prefetch=0,
            grid=(n_i, n_j, K // tk),
            in_specs=in_specs,
            out_specs=pl.BlockSpec((tm, tn), lambda i, j, k: (i, j)),
            scratch_shapes=[pltpu.VMEM((tm, tn), jnp.float32),      # f32 acc
                            pltpu.VMEM((tk, tn), jnp.bfloat16)]),   # dequant tile
        compiler_params=pltpu.CompilerParams(
            dimension_semantics=("parallel", "parallel", "arbitrary"),
            vmem_limit_bytes=_VMEM_LIMIT),
        cost_estimate=pl.CostEstimate(
            flops=2 * M_pad * N * (K + G), transcendentals=0,
            bytes_accessed=int(bytes_accessed)),
    )(*args)
    return out[:M]


# --------------------------- module equivalent --------------------------------


class IPEXLowbitGemmBase:
    def __init__(self, dtype, weight=None, bias=None, qweight=None, scales=None,
                 qzeros=None, blocksize=None, tp_size=1, tp_group=None):
        self.dtype = dtype
        self.tp_size = tp_size
        self.tp_group = tp_group
        # TODO(synk): tp_group all-reduce across tp_size shards is not modeled.
        self.bias = (None if bias is None
                     else jnp.asarray(bias, jnp.float32).reshape(1, -1))

        if dtype == GemmDtype.FP16:
            # Pre-transpose once at load time -> MXU-friendly [K, N] RHS.
            self.weight_t = jnp.asarray(weight).T
        elif dtype == GemmDtype.W4A16_GPTQ:
            self.blocksize = blocksize
            K8, N = qweight.shape
            K = K8 * 8
            assert K % blocksize == 0 and blocksize % 8 == 0
            self.tk = _pick_tk_w4(K, blocksize)
            # Load-time weight repack (analog of load_parameter); off hot path.
            self.qweight_rp = repack_gptq_qweight(jnp.asarray(qweight), self.tk)
            # Unpack the 4-bit zero points once (tiny [G, N]) and fold them
            # into scale*zero for the hoisted correction GEMM.
            n_idx = jnp.arange(N)
            zeros = ((jnp.asarray(qzeros)[:, n_idx // 8]
                      >> (4 * (n_idx % 8))) & 0xF).astype(jnp.float32)
            # TODO(synk): some real GPTQ exports store (zero - 1); matched to
            # the synthetic reference convention here.
            self.scales_f32 = jnp.asarray(scales, jnp.float32)
            self.szero = self.scales_f32 * zeros

    def forward_fp16(self, x):
        return fp16_gemm(x, self.weight_t, self.bias)

    def forward_w4a16(self, x):
        return w4a16_gemm(x, self.qweight_rp, self.scales_f32, self.szero,
                          self.bias, self.blocksize, self.tk)

    def forward(self, *args, **kwargs):
        if self.dtype == GemmDtype.FP16:
            return self.forward_fp16(*args, **kwargs)
        elif self.dtype == GemmDtype.W4A16_GPTQ:
            return self.forward_w4a16(*args, **kwargs)
        else:
            raise NotImplementedError(
                "QKVFusionGemm does not support this GemmType {} !".format(self.dtype))

    __call__ = forward


# ---------------------------------- main --------------------------------------

if __name__ == "__main__":
    key = jax.random.PRNGKey(0)
    M, K, N, blocksize = 8, 1024, 512, 64
    G, K8 = K // blocksize, K // 8

    k1, k2, k3, k4, k5, k6 = jax.random.split(key, 6)
    x = jax.random.normal(k1, (M, K), dtype=jnp.float32).astype(jnp.bfloat16)
    weight = jax.random.normal(k2, (N, K), dtype=jnp.float32).astype(jnp.bfloat16)
    bias = jax.random.normal(k3, (N,), dtype=jnp.float32)

    # ---- FP16 path (with bias) ----
    mod_fp16 = IPEXLowbitGemmBase(GemmDtype.FP16, weight=weight, bias=bias)
    y_fp16 = jax.block_until_ready(mod_fp16(x))
    ref_fp16 = x.astype(jnp.float32) @ weight.T.astype(jnp.float32) + bias
    assert jnp.allclose(y_fp16.astype(jnp.float32), ref_fp16, rtol=2e-2, atol=0.5)

    # ---- FP16 path (no bias: exercises the skipped-bias-stream kernel) ----
    mod_fp16_nb = IPEXLowbitGemmBase(GemmDtype.FP16, weight=weight, bias=None)
    y_fp16_nb = jax.block_until_ready(mod_fp16_nb(x))
    assert jnp.allclose(y_fp16_nb.astype(jnp.float32), ref_fp16 - bias,
                        rtol=2e-2, atol=0.5)

    # ---- W4A16 (GPTQ) path: build packed int4 weights deterministically ----
    qvals = jax.random.randint(k4, (K, N), 0, 16, dtype=jnp.int32)     # 4-bit vals
    zvals = jax.random.randint(k5, (G, N), 0, 16, dtype=jnp.int32)     # 4-bit zps
    scales = jax.random.uniform(k6, (G, N), jnp.float32, 0.5, 1.5)

    shifts_k = (4 * jnp.arange(8, dtype=jnp.uint32)).reshape(1, 8, 1)
    qweight = jax.lax.bitcast_convert_type(
        jnp.sum(qvals.astype(jnp.uint32).reshape(K8, 8, N) << shifts_k, axis=1)
        .astype(jnp.uint32), jnp.int32)                                 # [K//8, N]

    shifts_n = (4 * jnp.arange(8, dtype=jnp.uint32)).reshape(1, 1, 8)
    qzeros = jax.lax.bitcast_convert_type(
        jnp.sum(zvals.astype(jnp.uint32).reshape(G, N // 8, 8) << shifts_n, axis=2)
        .astype(jnp.uint32), jnp.int32)                                 # [G, N//8]

    mod_w4 = IPEXLowbitGemmBase(GemmDtype.W4A16_GPTQ, bias=bias, qweight=qweight,
                                scales=scales, qzeros=qzeros, blocksize=blocksize)
    y_w4 = jax.block_until_ready(mod_w4(x))

    w_deq = (qvals.astype(jnp.float32)
             - jnp.repeat(zvals.astype(jnp.float32), blocksize, axis=0)) \
        * jnp.repeat(scales, blocksize, axis=0)
    ref_w4 = x.astype(jnp.float32) @ w_deq + bias
    assert jnp.allclose(y_w4.astype(jnp.float32), ref_w4, rtol=2e-2, atol=2.0)

    print("KERNEL_OK")
</pallas_src>

<mosaic_0001>
module attributes {stable_mosaic.version = 11 : i64} {
  func.func @_fp16_kernel(%arg0: i32, %arg1: i32, %arg2: i32, %arg3: memref<8x1024xbf16, #tpu.memory_space<vmem>>, %arg4: memref<1024x256xbf16, #tpu.memory_space<vmem>>, %arg5: memref<1x256xf32, #tpu.memory_space<vmem>>, %arg6: memref<8x256xbf16, #tpu.memory_space<vmem>>, %arg7: memref<8x256xf32, #tpu.memory_space<vmem>>) attributes {dimension_semantics = [#tpu.dimension_semantics<parallel>, #tpu.dimension_semantics<parallel>, #tpu.dimension_semantics<arbitrary>], iteration_bounds = array<i64: 1, 2, 1>, scalar_prefetch = 0 : i64, scratch_operands = 1 : i64, tpu.core_type = #tpu.core_type<tc>, window_params = [{transform_indices = @transform_0, window_bounds = array<i64: 8, 1024>}, {transform_indices = @transform_1, window_bounds = array<i64: 1024, 256>}, {transform_indices = @transform_2, window_bounds = array<i64: 1, 256>}, {transform_indices = @transform_3, window_bounds = array<i64: 8, 256>}]} {
    %c0_i32 = arith.constant 0 : i32
    %0 = arith.cmpi eq, %arg2, %c0_i32 : i32
    %1 = arith.extui %0 : i1 to i32
    %c0_i32_0 = arith.constant 0 : i32
    %2 = arith.cmpi ne, %1, %c0_i32_0 : i32
    scf.if %2 {
      %cst_10 = arith.constant 0.000000e+00 : f32
      %12 = vector.broadcast %cst_10 : f32 to vector<8x256xf32>
      %c0_11 = arith.constant 0 : index
      %c0_12 = arith.constant 0 : index
      %13 = vector.load %arg7[%c0_11, %c0_12] : memref<8x256xf32, #tpu.memory_space<vmem>>, vector<8x256xf32>
      tpu.vector_store %arg7[%c0_11, %c0_12], %12 {strides = array<i32>} : memref<8x256xf32, #tpu.memory_space<vmem>>, vector<8x256xf32>,
    } else {
    }
    %c0 = arith.constant 0 : index
    %c0_1 = arith.constant 0 : index
    %3 = vector.load %arg7[%c0, %c0_1] : memref<8x256xf32, #tpu.memory_space<vmem>>, vector<8x256xf32>
    %c0_2 = arith.constant 0 : index
    %c0_3 = arith.constant 0 : index
    %4 = vector.load %arg3[%c0_2, %c0_3] : memref<8x1024xbf16, #tpu.memory_space<vmem>>, vector<8x1024xbf16>
    %c0_4 = arith.constant 0 : index
    %c0_5 = arith.constant 0 : index
    %5 = vector.load %arg4[%c0_4, %c0_5] : memref<1024x256xbf16, #tpu.memory_space<vmem>>, vector<1024x256xbf16>
    %cst = arith.constant dense<0.000000e+00> : vector<8x256xf32>
    %6 = tpu.matmul %4, %5, %cst {dimension_numbers = #tpu.dot_dimension_numbers<[1], [0], [0], [1], [0, 0, 1, 1], [], []>} : vector<8x1024xbf16>, vector<1024x256xbf16>, vector<8x256xf32> -> vector<8x256xf32>
    %7 = arith.addf %3, %6 : vector<8x256xf32>
    %c0_6 = arith.constant 0 : index
    %c0_7 = arith.constant 0 : index
    %8 = vector.load %arg7[%c0_6, %c0_7] : memref<8x256xf32, #tpu.memory_space<vmem>>, vector<8x256xf32>
    tpu.vector_store %arg7[%c0_6, %c0_7], %7 {strides = array<i32>} : memref<8x256xf32, #tpu.memory_space<vmem>>, vector<8x256xf32>,
    %c0_i32_8 = arith.constant 0 : i32
    %9 = arith.cmpi eq, %arg2, %c0_i32_8 : i32
    %10 = arith.extui %9 : i1 to i32
    %c0_i32_9 = arith.constant 0 : i32
    %11 = arith.cmpi ne, %10, %c0_i32_9 : i32
    scf.if %11 {
      %c0_10 = arith.constant 0 : index
      %c0_11 = arith.constant 0 : index
      %12 = vector.load %arg7[%c0_10, %c0_11] : memref<8x256xf32, #tpu.memory_space<vmem>>, vector<8x256xf32>
      %c0_12 = arith.constant 0 : index
      %c0_13 = arith.constant 0 : index
      %13 = vector.load %arg5[%c0_12, %c0_13] : memref<1x256xf32, #tpu.memory_space<vmem>>, vector<1x256xf32>
      %14 = vector.broadcast %13 : vector<1x256xf32> to vector<8x256xf32>
      %15 = arith.addf %12, %14 : vector<8x256xf32>
      %16 = arith.truncf %15 : vector<8x256xf32> to vector<8x256xbf16>
      %c0_14 = arith.constant 0 : index
      %c0_15 = arith.constant 0 : index
      %17 = vector.load %arg6[%c0_14, %c0_15] : memref<8x256xbf16, #tpu.memory_space<vmem>>, vector<8x256xbf16>
      tpu.vector_store %arg6[%c0_14, %c0_15], %16 {strides = array<i32>} : memref<8x256xbf16, #tpu.memory_space<vmem>>, vector<8x256xbf16>,
    } else {
    }
    return
  }
  func.func @transform_0(%arg0: i32, %arg1: i32, %arg2: i32) -> (i32, i32) {
    %c0_i32 = arith.constant 0 : i32
    return %arg0, %arg2 : i32, i32
  }
  func.func @transform_1(%arg0: i32, %arg1: i32, %arg2: i32) -> (i32, i32) {
    %c0_i32 = arith.constant 0 : i32
    return %arg2, %arg1 : i32, i32
  }
  func.func @transform_2(%arg0: i32, %arg1: i32, %arg2: i32) -> (i32, i32) {
    %c0_i32 = arith.constant 0 : i32
    %c0_i32_0 = arith.constant 0 : i32
    return %c0_i32, %arg1 : i32, i32
  }
  func.func @transform_3(%arg0: i32, %arg1: i32, %arg2: i32) -> (i32, i32) {
    %c0_i32 = arith.constant 0 : i32
    return %arg0, %arg1 : i32, i32
  }
}

</mosaic_0001>

<llo_original>
// kernel: tpu_custom_call.1
$region0: #{tpu_custom_call.1}
  #allocation0 [shape = 'u32[]', space=smem, size = 0x4, offset = 0x4, fixed_abs, tag = 'smem constant byte address 0x4 - core index']
  #allocation1 [shape = 'u32[144,128]{1,0:T(1,128)}', space=vmem, size = 0x12000, scoped, tag = 'internal scratch']
  #allocation2 [shape = 'f32[8,256]{1,0:T(8,128)}', space=vmem, size = 0x2000, scoped, tag = 'scratch operand']
  %s0 = inlined_call_operand.hbm [shape: bf16[8,1024], index: 0, kind: input, shape index: {}]
  %s1 = inlined_call_operand.hbm [shape: bf16[1024,512], index: 1, kind: input, shape index: {}]
  %s2 = inlined_call_operand.vmem [shape: f32[1,512], index: 2, kind: input, shape index: {}]
  %s3 = inlined_call_operand.hbm [shape: bf16[8,512], index: 3, kind: output, shape index: {}]
  %s4 = sld [smem:[#allocation0]]
  $region61: #{tpu_custom_call.1} parent=0
    _
  %s6 = ssub.s32 1, %s4
  %s7 = scalar_select 0, %s6, %s4
  $region1: #{tpu_custom_call.1} parent=0
    #allocation3 [shape = 'u8[16384]{0}', space=vmem, size = 0x4000, scoped, tag = 'input window, operand 0, single buffered']
    #allocation4 [shape = 's32[2]{0}', space=sflag, size = 0x8, scoped, tag = 'scoped memory for tpu_custom_call.1']
    #allocation5 [shape = 's32[2]{0}', space=sflag, size = 0x8, scoped, tag = 'scoped memory for tpu_custom_call.1']
    #allocation6 [shape = 'u8[1048576]{0}', space=vmem, size = 0x100000, scoped, tag = 'input window, operand 1']
    #allocation7 [shape = 's32[2]{0}', space=sflag, size = 0x8, scoped, tag = 'scoped memory for tpu_custom_call.1']
    #allocation8 [shape = 'u8[8192]{0}', space=vmem, size = 0x2000, scoped, tag = 'output window, operand 0']
    %8 = vsyncpa [#allocation4], 0
    %9 = vsyncpa [#allocation7], 0
    %s10 = scalar_lea.sflag [#allocation7], 1
    %11 = vsyncpa %s10, 0
    %12 = vsyncpa [#allocation5], 0
    %s13 = scalar_lea.sflag [#allocation5], 1
    %14 = vsyncpa %s13, 0
    loop: start=0, step=1, limit=4
    $region2: #{tpu_custom_call.1} parent=1 // loop_pre_header
      _
    $region3: #{tpu_custom_call.1} parent=1 // loop_header
      %s16 = sphi 0, %s20
      %p17 = scmp.ge.s32.totalorder %s16, 4
      %s23 = sphi 0, %s42
      %s24 = sphi 0, %s38
      %s25 = sphi 0, %s34
      %s26 = sphi 0, %s23
      %s27 = sphi 0, %s24
      %s28 = sphi 0, %s25
      %s29 = sphi 0, %s26
      %s30 = sphi 0, %s27
      %s31 = sphi 0, %s28
      %s47 = sphi 0, %s49
      %s50 = sphi 0, %s47
      %s51 = sphi 0, %s50
      %s67 = sphi 0, %s51
      %s75 = sphi 0, %s77
      %s78 = sphi 0, %s75
      %s79 = sphi 0, %s78
      %s95 = sphi 0, %s79
      %s101 = sphi 0, %s103
      %s104 = sphi 0, %s101
      %s105 = sphi 0, %s104
      %s121 = sphi 0, %s105
      %s129 = sphi 0, %s131
      %s132 = sphi 0, %s129
      %s133 = sphi 0, %s132
      %s149 = sphi 0, %s133
    $region4: #{tpu_custom_call.1} parent=1 // loop_header_branch
      %19 = sbr.rel (%p17) target = $region8
    $region5: #{tpu_custom_call.1} parent=1 // loop_body
      %s21 = ssub.s32 %s16, 1
      %s22 = ssub.s32 %s16, 2
      %s32 = sadd.s32 1, %s25
      %p33 = scmp.ge.s32.totalorder %s32, 1
      %s34 = scalar_select %p33, 0, %s32
      %s35 = sadd.s32 1, %s24
      %s36 = scalar_select %p33, %s35, %s24
      %p37 = scmp.ge.s32.totalorder %s36, 2
      %s38 = scalar_select %p37, 0, %s36
      %s39 = sadd.s32 1, %s23
      %s40 = scalar_select %p37, %s39, %s23
      %p41 = scmp.ge.s32.totalorder %s40, 1
      %s42 = scalar_select %p41, 0, %s40
      %s43 = ssub.s32 %s23, %s42
      %s44 = ssub.s32 %s25, %s34
      %s45 = sor.u32 %s43, %s44
      %p46 = scmp.eq.s32.totalorder %s45, 0
      %s48 = sadd.s32 %s47, 1
      %s49 = scalar_select %p46, %s47, %s48
      %p52 = pneg %p46
      %p53 = scmp.eq.s32.totalorder %s16, 1
      %p54 = por %p52, %p53
      %p55 = scmp.ne.s32.totalorder %s47, %s50
      %p56 = scmp.eq.s32.totalorder %s16, 0
      %p57 = por %p55, %p56
      %p58 = scmp.ne.s32.totalorder %s47, %s50
      %p59 = scmp.eq.s32.totalorder %s21, 1
      %p60 = por %p58, %p59
      %p61 = scmp.ne.s32.totalorder %s50, %s51
      %p62 = scmp.eq.s32.totalorder %s21, 0
      %p63 = por %p61, %p62
      %p64 = scmp.ne.s32.totalorder %s50, %s51
      %p65 = scmp.eq.s32.totalorder %s22, 1
      %p66 = por %p64, %p65
      %p68 = scmp.ne.s32.totalorder %s51, %s67
      %p69 = scmp.eq.s32.totalorder %s22, 0
      %p70 = por %p68, %p69
      %s71 = ssub.s32 %s25, %s34
      %s72 = ssub.s32 %s24, %s38
      %s73 = sor.u32 %s71, %s72
      %p74 = scmp.eq.s32.totalorder %s73, 0
      %s76 = sadd.s32 %s75, 1
      %s77 = scalar_select %p74, %s75, %s76
      %p80 = pneg %p74
      %p81 = scmp.eq.s32.totalorder %s16, 1
      %p82 = por %p80, %p81
      %p83 = scmp.ne.s32.totalorder %s75, %s78
      %p84 = scmp.eq.s32.totalorder %s16, 0
      %p85 = por %p83, %p84
      %p86 = scmp.ne.s32.totalorder %s75, %s78
      %p87 = scmp.eq.s32.totalorder %s21, 1
      %p88 = por %p86, %p87
      %p89 = scmp.ne.s32.totalorder %s78, %s79
      %p90 = scmp.eq.s32.totalorder %s21, 0
      %p91 = por %p89, %p90
      %p92 = scmp.ne.s32.totalorder %s78, %s79
      %p93 = scmp.eq.s32.totalorder %s22, 1
      %p94 = por %p92, %p93
      %p96 = scmp.ne.s32.totalorder %s79, %s95
      %p97 = scmp.eq.s32.totalorder %s22, 0
      %p98 = por %p96, %p97
      %s99 = ssub.s32 %s24, %s38
      %p100 = scmp.eq.s32.totalorder %s99, 0
      %s102 = sadd.s32 %s101, 1
      %s103 = scalar_select %p100, %s101, %s102
      %p106 = pneg %p100
      %p107 = scmp.eq.s32.totalorder %s16, 1
      %p108 = por %p106, %p107
      %p109 = scmp.ne.s32.totalorder %s101, %s104
      %p110 = scmp.eq.s32.totalorder %s16, 0
      %p111 = por %p109, %p110
      %p112 = scmp.ne.s32.totalorder %s101, %s104
      %p113 = scmp.eq.s32.totalorder %s21, 1
      %p114 = por %p112, %p113
      %p115 = scmp.ne.s32.totalorder %s104, %s105
      %p116 = scmp.eq.s32.totalorder %s21, 0
      %p117 = por %p115, %p116
      %p118 = scmp.ne.s32.totalorder %s104, %s105
      %p119 = scmp.eq.s32.totalorder %s22, 1
      %p120 = por %p118, %p119
      %p122 = scmp.ne.s32.totalorder %s105, %s121
      %p123 = scmp.eq.s32.totalorder %s22, 0
      %p124 = por %p122, %p123
      %s125 = ssub.s32 %s23, %s42
      %s126 = ssub.s32 %s24, %s38
      %s127 = sor.u32 %s125, %s126
      %p128 = scmp.eq.s32.totalorder %s127, 0
      %s130 = sadd.s32 %s129, 1
      %s131 = scalar_select %p128, %s129, %s130
      %p134 = pneg %p128
      %p135 = scmp.eq.s32.totalorder %s16, 1
      %p136 = por %p134, %p135
      %p137 = scmp.ne.s32.totalorder %s129, %s132
      %p138 = scmp.eq.s32.totalorder %s16, 0
      %p139 = por %p137, %p138
      %p140 = scmp.ne.s32.totalorder %s129, %s132
      %p141 = scmp.eq.s32.totalorder %s21, 1
      %p142 = por %p140, %p141
      %p143 = scmp.ne.s32.totalorder %s132, %s133
      %p144 = scmp.eq.s32.totalorder %s21, 0
      %p145 = por %p143, %p144
      %p146 = scmp.ne.s32.totalorder %s132, %s133
      %p147 = scmp.eq.s32.totalorder %s22, 1
      %p148 = por %p146, %p147
      %p150 = scmp.ne.s32.totalorder %s133, %s149
      %p151 = scmp.eq.s32.totalorder %s22, 0
      %p152 = por %p150, %p151
      %p153 = scmp.le.s32.totalorder 1, %s16
      %p154 = scmp.lt.s32.totalorder %s16, 3
      %p155 = pnand %p153, %p154
      %p156 = pneg %p155
      // Predicated region
      $region9: #{tpu_custom_call.1} parent=5 // pred_check
        _
      $region10: #{tpu_custom_call.1} parent=5 // pred_check_branch
        %158 = sbr.rel (%p155) target = $region12
      $region11: #{tpu_custom_call.1} parent=5 // pred_region
        %s159 = ssub.s32 %s16, 1
        // Predicated region
        $region13: #{tpu_custom_call.1} parent=11 // pred_check
          %p160 = pneg %p63
        $region14: #{tpu_custom_call.1} parent=11 // pred_check_branch
          %162 = sbr.rel (%p160) target = $region16
        $region15: #{tpu_custom_call.1} parent=11 // pred_region
          %s163 = smul.u32 8, %s28
          %s165 = ssub.s32 512, 512
          %166 = vsyncadd [#allocation4], %s165
          %s167 = smul.addr %s26, 8
          %s168 = sadd.s32 %s163, %s167
          %s169 = smul.addr %s168, 64
          %s170 = scalar_lea.hbm %s0, %s169
          %s172 = sshll.u32 [#allocation3], 4
          %s173 = int_to_ptr.vmem [resolvable:$true] %s172
          %175 = dma.hbm_to_vmem [thread:$0]  %s170, 512, %s173, [#allocation4]
        $region16: #{tpu_custom_call.1} parent=11 // pred_fallthru
          _
      $region12: #{tpu_custom_call.1} parent=5 // pred_fallthru
        _
      %p176 = scmp.lt.s32.totalorder %s16, 2
      // Predicated region
      $region17: #{tpu_custom_call.1} parent=5 // pred_check
        %p177 = pneg %p176
      $region18: #{tpu_custom_call.1} parent=5 // pred_check_branch
        %179 = sbr.rel (%p177) target = $region20
      $region19: #{tpu_custom_call.1} parent=5 // pred_region
        // Predicated region
        $region21: #{tpu_custom_call.1} parent=19 // pred_check
          %p180 = pneg %p85
        $region22: #{tpu_custom_call.1} parent=19 // pred_check_branch
          %182 = sbr.rel (%p180) target = $region24
        $region23: #{tpu_custom_call.1} parent=19 // pred_region
          %s183 = sand.u32 %s75, 1
          %s184 = scalar_lea.sflag [#allocation7], %s183
          %s185 = sand.u32 %s75, 1
          %s186 = smul.addr %s185, 1024
          %s187 = scalar_lea.vmem [#allocation6], %s186
          %s188 = smul.u32 128, %s25
          %s189 = smul.u32 2, %s24
          %s191 = ssub.s32 16384, 16384
          %192 = vsyncadd %s184, %s191
          %s193 = smul.addr %s188, 4
          %s194 = sadd.s32 %s189, %s193
          %s195 = smul.addr %s194, 64
          %s196 = scalar_lea.hbm %s1, %s195
          %s197 = sshll.u32 %s187, 4
          %s198 = int_to_ptr.vmem [resolvable:$true] %s197
          %203 = dma.hbm_to_vmem [thread:$0]  %s196, 16384, %s198, %s184, 256, 128, 8
        $region24: #{tpu_custom_call.1} parent=19 // pred_fallthru
          _
        // Predicated region
        $region25: #{tpu_custom_call.1} parent=19 // pred_check
          %p204 = pneg %p111
        $region26: #{tpu_custom_call.1} parent=19 // pred_check_branch
          %206 = sbr.rel (%p204) target = $region28
        $region27: #{tpu_custom_call.1} parent=19 // pred_region
          %s207 = smul.u32 2, %s24
          %p208 = scmp.lt.s32.totalorder %s207, 3
          %s209 = scalar_select %p208, %s207, 3
          %s210 = scalar_lea.vmem %s2, %s209
          %s211 = smul.u32 2, %s24
        $region28: #{tpu_custom_call.1} parent=19 // pred_fallthru
          _
      $region20: #{tpu_custom_call.1} parent=5 // pred_fallthru
        _
      %p212 = scmp.le.s32.totalorder 1, %s16
      %p213 = scmp.lt.s32.totalorder %s16, 3
      %p214 = pnand %p212, %p213
      %p215 = pneg %p214
      // Predicated region
      $region29: #{tpu_custom_call.1} parent=5 // pred_check
        _
      $region30: #{tpu_custom_call.1} parent=5 // pred_check_branch
        %217 = sbr.rel (%p214) target = $region32
      $region31: #{tpu_custom_call.1} parent=5 // pred_region
        %s218 = ssub.s32 %s16, 1
        // Predicated region
        $region33: #{tpu_custom_call.1} parent=31 // pred_check
          %p219 = pneg %p63
        $region34: #{tpu_custom_call.1} parent=31 // pred_check_branch
          %221 = sbr.rel (%p219) target = $region36
        $region35: #{tpu_custom_call.1} parent=31 // pred_region
          %222 = dma.done [#allocation4], 512
        $region36: #{tpu_custom_call.1} parent=31 // pred_fallthru
          _
        %s223 = sand.u32 %s78, 1
        %s224 = scalar_lea.sflag [#allocation7], %s223
        %s225 = sand.u32 %s78, 1
        %s226 = smul.addr %s225, 1024
        %s227 = scalar_lea.vmem [#allocation6], %s226
        // Predicated region
        $region37: #{tpu_custom_call.1} parent=31 // pred_check
          %p228 = pneg %p91
        $region38: #{tpu_custom_call.1} parent=31 // pred_check_branch
          %230 = sbr.rel (%p228) target = $region40
        $region39: #{tpu_custom_call.1} parent=31 // pred_region
          %231 = dma.done %s224, 16384
        $region40: #{tpu_custom_call.1} parent=31 // pred_fallthru
          _
        %p232 = pneg %p63
        %p233 = pneg %p60
        %s234 = sand.u32 %s78, 1
        %s235 = scalar_lea.sflag [#allocation7], %s234
        %s236 = sand.u32 %s78, 1
        %s237 = smul.addr %s236, 1024
        %s238 = scalar_lea.vmem [#allocation6], %s237
        %p239 = pneg %p91
        %p240 = pneg %p88
        %s241 = smul.u32 2, %s27
        %p242 = scmp.lt.s32.totalorder %s241, 3
        %s243 = scalar_select %p242, %s241, 3
        %s244 = scalar_lea.vmem %s2, %s243
        %p245 = pneg %p117
        %p246 = pneg %p114
        %p247 = pneg %p145
        %p248 = pneg %p142
        %s249 = sand.u32 %s132, 1
        %s250 = scalar_lea.sflag [#allocation5], %s249
        %s251 = sand.u32 %s132, 1
        %s252 = smul.addr %s251, 8
        %s253 = scalar_lea.vmem [#allocation8], %s252
        %s254 = smul.u32 8, %s28
        %s255 = smul.u32 128, %s28
        %s256 = smul.u32 2, %s27
        %s257 = smul.u32 2, %s27
        %p258 = scmp.lt.s32.totalorder %s257, 3
        %s259 = scalar_select %p258, %s257, 3
        %s260 = scalar_lea.vmem %s2, %s259
        %s261 = smul.u32 2, %s27
        %s262 = smul.u32 2, %s27
        %p263 = scmp.eq.s32.totalorder %s28, 0
        // Predicated region
        $region41: #{tpu_custom_call.1} parent=31 // pred_check
          %p264 = pneg %p263
        $region42: #{tpu_custom_call.1} parent=31 // pred_check_branch
          %266 = sbr.rel (%p264) target = $region44
        $region43: #{tpu_custom_call.1} parent=31 // pred_region
          %267 = vst [vmem:[#allocation2] sm:$0xff] 0.0
          %268 = vst [vmem:[#allocation2 + $0x8] sm:$0xff] 0.0
        $region44: #{tpu_custom_call.1} parent=31 // pred_fallthru
          _
        %v269 = vld [vmem:[#allocation2] sm:$0xff]
        %v270 = vld [vmem:[#allocation2 + $0x8] sm:$0xff]
        %v271 = vld [vmem:[#allocation3] sm:$0xff]
        %v272 = vld [vmem:[#allocation3 + $0x8] sm:$0xff]
        %v273 = vld [vmem:[#allocation3 + $0x10] sm:$0xff]
        %v274 = vld [vmem:[#allocation3 + $0x18] sm:$0xff]
        %v275 = vld [vmem:[%s227] sm:$0xff]
        %v276 = vld [vmem:[%s227 + $0x8] sm:$0xff]
        %v277 = vld [vmem:[%s227 + $0x10] sm:$0xff]
        %v278 = vld [vmem:[%s227 + $0x18] sm:$0xff]
        %v279 = vld [vmem:[%s227 + $0x20] sm:$0xff]
        %v280 = vld [vmem:[%s227 + $0x28] sm:$0xff]
        %v281 = vld [vmem:[%s227 + $0x30] sm:$0xff]
        %v282 = vld [vmem:[%s227 + $0x38] sm:$0xff]
        %v283 = vld [vmem:[%s227 + $0x40] sm:$0xff]
        %v284 = vld [vmem:[%s227 + $0x48] sm:$0xff]
        %v285 = vld [vmem:[%s227 + $0x50] sm:$0xff]
        %v286 = vld [vmem:[%s227 + $0x58] sm:$0xff]
        %v287 = vld [vmem:[%s227 + $0x60] sm:$0xff]
        %v288 = vld [vmem:[%s227 + $0x68] sm:$0xff]
        %v289 = vld [vmem:[%s227 + $0x70] sm:$0xff]
        %v290 = vld [vmem:[%s227 + $0x78] sm:$0xff]
        %v291 = vld [vmem:[%s227 + $0x80] sm:$0xff]
        %v292 = vld [vmem:[%s227 + $0x88] sm:$0xff]
        %v293 = vld [vmem:[%s227 + $0x90] sm:$0xff]
        %v294 = vld [vmem:[%s227 + $0x98] sm:$0xff]
        %v295 = vld [vmem:[%s227 + $0xa0] sm:$0xff]
        %v296 = vld [vmem:[%s227 + $0xa8] sm:$0xff]
        %v297 = vld [vmem:[%s227 + $0xb0] sm:$0xff]
        %v298 = vld [vmem:[%s227 + $0xb8] sm:$0xff]
        %v299 = vld [vmem:[%s227 + $0xc0] sm:$0xff]
        %v300 = vld [vmem:[%s227 + $0xc8] sm:$0xff]
        %v301 = vld [vmem:[%s227 + $0xd0] sm:$0xff]
        %v302 = vld [vmem:[%s227 + $0xd8] sm:$0xff]
        %v303 = vld [vmem:[%s227 + $0xe0] sm:$0xff]
        %v304 = vld [vmem:[%s227 + $0xe8] sm:$0xff]
        %v305 = vld [vmem:[%s227 + $0xf0] sm:$0xff]
        %v306 = vld [vmem:[%s227 + $0xf8] sm:$0xff]
        %v307 = vld [vmem:[%s227 + $0x100] sm:$0xff]
        %v308 = vld [vmem:[%s227 + $0x108] sm:$0xff]
        %v309 = vld [vmem:[%s227 + $0x110] sm:$0xff]
        %v310 = vld [vmem:[%s227 + $0x118] sm:$0xff]
        %v311 = vld [vmem:[%s227 + $0x120] sm:$0xff]
        %v312 = vld [vmem:[%s227 + $0x128] sm:$0xff]
        %v313 = vld [vmem:[%s227 + $0x130] sm:$0xff]
        %v314 = vld [vmem:[%s227 + $0x138] sm:$0xff]
        %v315 = vld [vmem:[%s227 + $0x140] sm:$0xff]
        %v316 = vld [vmem:[%s227 + $0x148] sm:$0xff]
        %v317 = vld [vmem:[%s227 + $0x150] sm:$0xff]
        %v318 = vld [vmem:[%s227 + $0x158] sm:$0xff]
        %v319 = vld [vmem:[%s227 + $0x160] sm:$0xff]
        %v320 = vld [vmem:[%s227 + $0x168] sm:$0xff]
        %v321 = vld [vmem:[%s227 + $0x170] sm:$0xff]
        %v322 = vld [vmem:[%s227 + $0x178] sm:$0xff]
        %v323 = vld [vmem:[%s227 + $0x180] sm:$0xff]
        %v324 = vld [vmem:[%s227 + $0x188] sm:$0xff]
        %v325 = vld [vmem:[%s227 + $0x190] sm:$0xff]
        %v326 = vld [vmem:[%s227 + $0x198] sm:$0xff]
        %v327 = vld [vmem:[%s227 + $0x1a0] sm:$0xff]
        %v328 = vld [vmem:[%s227 + $0x1a8] sm:$0xff]
        %v329 = vld [vmem:[%s227 + $0x1b0] sm:$0xff]
        %v330 = vld [vmem:[%s227 + $0x1b8] sm:$0xff]
        %v331 = vld [vmem:[%s227 + $0x1c0] sm:$0xff]
        %v332 = vld [vmem:[%s227 + $0x1c8] sm:$0xff]
        %v333 = vld [vmem:[%s227 + $0x1d0] sm:$0xff]
        %v334 = vld [vmem:[%s227 + $0x1d8] sm:$0xff]
        %v335 = vld [vmem:[%s227 + $0x1e0] sm:$0xff]
        %v336 = vld [vmem:[%s227 + $0x1e8] sm:$0xff]
        %v337 = vld [vmem:[%s227 + $0x1f0] sm:$0xff]
        %v338 = vld [vmem:[%s227 + $0x1f8] sm:$0xff]
        %v339 = vld [vmem:[%s227 + $0x200] sm:$0xff]
        %v340 = vld [vmem:[%s227 + $0x208] sm:$0xff]
        %v341 = vld [vmem:[%s227 + $0x210] sm:$0xff]
        %v342 = vld [vmem:[%s227 + $0x218] sm:$0xff]
        %v343 = vld [vmem:[%s227 + $0x220] sm:$0xff]
        %v344 = vld [vmem:[%s227 + $0x228] sm:$0xff]
        %v345 = vld [vmem:[%s227 + $0x230] sm:$0xff]
        %v346 = vld [vmem:[%s227 + $0x238] sm:$0xff]
        %v347 = vld [vmem:[%s227 + $0x240] sm:$0xff]
        %v348 = vld [vmem:[%s227 + $0x248] sm:$0xff]
        %v349 = vld [vmem:[%s227 + $0x250] sm:$0xff]
        %v350 = vld [vmem:[%s227 + $0x258] sm:$0xff]
        %v351 = vld [vmem:[%s227 + $0x260] sm:$0xff]
        %v352 = vld [vmem:[%s227 + $0x268] sm:$0xff]
        %v353 = vld [vmem:[%s227 + $0x270] sm:$0xff]
        %v354 = vld [vmem:[%s227 + $0x278] sm:$0xff]
        %v355 = vld [vmem:[%s227 + $0x280] sm:$0xff]
        %v356 = vld [vmem:[%s227 + $0x288] sm:$0xff]
        %v357 = vld [vmem:[%s227 + $0x290] sm:$0xff]
        %v358 = vld [vmem:[%s227 + $0x298] sm:$0xff]
        %v359 = vld [vmem:[%s227 + $0x2a0] sm:$0xff]
        %v360 = vld [vmem:[%s227 + $0x2a8] sm:$0xff]
        %v361 = vld [vmem:[%s227 + $0x2b0] sm:$0xff]
        %v362 = vld [vmem:[%s227 + $0x2b8] sm:$0xff]
        %v363 = vld [vmem:[%s227 + $0x2c0] sm:$0xff]
        %v364 = vld [vmem:[%s227 + $0x2c8] sm:$0xff]
        %v365 = vld [vmem:[%s227 + $0x2d0] sm:$0xff]
        %v366 = vld [vmem:[%s227 + $0x2d8] sm:$0xff]
        %v367 = vld [vmem:[%s227 + $0x2e0] sm:$0xff]
        %v368 = vld [vmem:[%s227 + $0x2e8] sm:$0xff]
        %v369 = vld [vmem:[%s227 + $0x2f0] sm:$0xff]
        %v370 = vld [vmem:[%s227 + $0x2f8] sm:$0xff]
        %v371 = vld [vmem:[%s227 + $0x300] sm:$0xff]
        %v372 = vld [vmem:[%s227 + $0x308] sm:$0xff]
        %v373 = vld [vmem:[%s227 + $0x310] sm:$0xff]
        %v374 = vld [vmem:[%s227 + $0x318] sm:$0xff]
        %v375 = vld [vmem:[%s227 + $0x320] sm:$0xff]
        %v376 = vld [vmem:[%s227 + $0x328] sm:$0xff]
        %v377 = vld [vmem:[%s227 + $0x330] sm:$0xff]
        %v378 = vld [vmem:[%s227 + $0x338] sm:$0xff]
        %v379 = vld [vmem:[%s227 + $0x340] sm:$0xff]
        %v380 = vld [vmem:[%s227 + $0x348] sm:$0xff]
        %v381 = vld [vmem:[%s227 + $0x350] sm:$0xff]
        %v382 = vld [vmem:[%s227 + $0x358] sm:$0xff]
        %v383 = vld [vmem:[%s227 + $0x360] sm:$0xff]
        %v384 = vld [vmem:[%s227 + $0x368] sm:$0xff]
        %v385 = vld [vmem:[%s227 + $0x370] sm:$0xff]
        %v386 = vld [vmem:[%s227 + $0x378] sm:$0xff]
        %v387 = vld [vmem:[%s227 + $0x380] sm:$0xff]
        %v388 = vld [vmem:[%s227 + $0x388] sm:$0xff]
        %v389 = vld [vmem:[%s227 + $0x390] sm:$0xff]
        %v390 = vld [vmem:[%s227 + $0x398] sm:$0xff]
        %v391 = vld [vmem:[%s227 + $0x3a0] sm:$0xff]
        %v392 = vld [vmem:[%s227 + $0x3a8] sm:$0xff]
        %v393 = vld [vmem:[%s227 + $0x3b0] sm:$0xff]
        %v394 = vld [vmem:[%s227 + $0x3b8] sm:$0xff]
        %v395 = vld [vmem:[%s227 + $0x3c0] sm:$0xff]
        %v396 = vld [vmem:[%s227 + $0x3c8] sm:$0xff]
        %v397 = vld [vmem:[%s227 + $0x3d0] sm:$0xff]
        %v398 = vld [vmem:[%s227 + $0x3d8] sm:$0xff]
        %v399 = vld [vmem:[%s227 + $0x3e0] sm:$0xff]
        %v400 = vld [vmem:[%s227 + $0x3e8] sm:$0xff]
        %v401 = vld [vmem:[%s227 + $0x3f0] sm:$0xff]
        %v402 = vld [vmem:[%s227 + $0x3f8] sm:$0xff]
        %v407 = vunpack.c.l.b16 %v271
        %v408 = vunpack.c.h.b16 %v271
        %v409 = vunpack.c.l.b16 %v272
        %v410 = vunpack.c.h.b16 %v272
        %v411 = vunpack.c.l.b16 %v273
        %v412 = vunpack.c.h.b16 %v273
        %v413 = vunpack.c.l.b16 %v274
        %v414 = vunpack.c.h.b16 %v274
        %v415 = vpack.c.b16 %v407, %v407
        %v416 = vpack.c.b16 %v408, %v408
        %v417 = vpack.c.b16 %v409, %v409
        %v418 = vpack.c.b16 %v410, %v410
        %v419 = vpack.c.b16 %v411, %v411
        %v420 = vpack.c.b16 %v412, %v412
        %v421 = vpack.c.b16 %v413, %v413
        %v422 = vpack.c.b16 %v414, %v414
        %v559 = vunpack.c.l.b16 %v275
        %v560 = vunpack.c.h.b16 %v275
        %v561 = vunpack.c.l.b16 %v276
        %v562 = vunpack.c.h.b16 %v276
        %v563 = vunpack.c.l.b16 %v277
        %v564 = vunpack.c.h.b16 %v277
        %v565 = vunpack.c.l.b16 %v278
        %v566 = vunpack.c.h.b16 %v278
        %v567 = vunpack.c.l.b16 %v279
        %v568 = vunpack.c.h.b16 %v279
        %v569 = vunpack.c.l.b16 %v280
        %v570 = vunpack.c.h.b16 %v280
        %v571 = vunpack.c.l.b16 %v281
        %v572 = vunpack.c.h.b16 %v281
        %v573 = vunpack.c.l.b16 %v282
        %v574 = vunpack.c.h.b16 %v282
        %v575 = vunpack.c.l.b16 %v283
        %v576 = vunpack.c.h.b16 %v283
        %v577 = vunpack.c.l.b16 %v284
        %v578 = vunpack.c.h.b16 %v284
        %v579 = vunpack.c.l.b16 %v285
        %v580 = vunpack.c.h.b16 %v285
        %v581 = vunpack.c.l.b16 %v286
        %v582 = vunpack.c.h.b16 %v286
        %v583 = vunpack.c.l.b16 %v287
        %v584 = vunpack.c.h.b16 %v287
        %v585 = vunpack.c.l.b16 %v288
        %v586 = vunpack.c.h.b16 %v288
        %v587 = vunpack.c.l.b16 %v289
        %v588 = vunpack.c.h.b16 %v289
        %v589 = vunpack.c.l.b16 %v290
        %v590 = vunpack.c.h.b16 %v290
        %v591 = vunpack.c.l.b16 %v291
        %v592 = vunpack.c.h.b16 %v291
        %v593 = vunpack.c.l.b16 %v292
        %v594 = vunpack.c.h.b16 %v292
        %v595 = vunpack.c.l.b16 %v293
        %v596 = vunpack.c.h.b16 %v293
        %v597 = vunpack.c.l.b16 %v294
        %v598 = vunpack.c.h.b16 %v294
        %v599 = vunpack.c.l.b16 %v295
        %v600 = vunpack.c.h.b16 %v295
        %v601 = vunpack.c.l.b16 %v296
        %v602 = vunpack.c.h.b16 %v296
        %v603 = vunpack.c.l.b16 %v297
        %v604 = vunpack.c.h.b16 %v297
        %v605 = vunpack.c.l.b16 %v298
        %v606 = vunpack.c.h.b16 %v298
        %v607 = vunpack.c.l.b16 %v299
        %v608 = vunpack.c.h.b16 %v299
        %v609 = vunpack.c.l.b16 %v300
        %v610 = vunpack.c.h.b16 %v300
        %v611 = vunpack.c.l.b16 %v301
        %v612 = vunpack.c.h.b16 %v301
        %v613 = vunpack.c.l.b16 %v302
        %v614 = vunpack.c.h.b16 %v302
        %v615 = vunpack.c.l.b16 %v303
        %v616 = vunpack.c.h.b16 %v303
        %v617 = vunpack.c.l.b16 %v304
        %v618 = vunpack.c.h.b16 %v304
        %v619 = vunpack.c.l.b16 %v305
        %v620 = vunpack.c.h.b16 %v305
        %v621 = vunpack.c.l.b16 %v306
        %v622 = vunpack.c.h.b16 %v306
        %v623 = vunpack.c.l.b16 %v307
        %v624 = vunpack.c.h.b16 %v307
        %v625 = vunpack.c.l.b16 %v308
        %v626 = vunpack.c.h.b16 %v308
        %v627 = vunpack.c.l.b16 %v309
        %v628 = vunpack.c.h.b16 %v309
        %v629 = vunpack.c.l.b16 %v310
        %v630 = vunpack.c.h.b16 %v310
        %v631 = vunpack.c.l.b16 %v311
        %v632 = vunpack.c.h.b16 %v311
        %v633 = vunpack.c.l.b16 %v312
        %v634 = vunpack.c.h.b16 %v312
        %v635 = vunpack.c.l.b16 %v313
        %v636 = vunpack.c.h.b16 %v313
        %v637 = vunpack.c.l.b16 %v314
        %v638 = vunpack.c.h.b16 %v314
        %v639 = vunpack.c.l.b16 %v315
        %v640 = vunpack.c.h.b16 %v315
        %v641 = vunpack.c.l.b16 %v316
        %v642 = vunpack.c.h.b16 %v316
        %v643 = vunpack.c.l.b16 %v317
        %v644 = vunpack.c.h.b16 %v317
        %v645 = vunpack.c.l.b16 %v318
        %v646 = vunpack.c.h.b16 %v318
        %v647 = vunpack.c.l.b16 %v319
        %v648 = vunpack.c.h.b16 %v319
        %v649 = vunpack.c.l.b16 %v320
        %v650 = vunpack.c.h.b16 %v320
        %v651 = vunpack.c.l.b16 %v321
        %v652 = vunpack.c.h.b16 %v321
        %v653 = vunpack.c.l.b16 %v322
        %v654 = vunpack.c.h.b16 %v322
        %v655 = vunpack.c.l.b16 %v323
        %v656 = vunpack.c.h.b16 %v323
        %v657 = vunpack.c.l.b16 %v324
        %v658 = vunpack.c.h.b16 %v324
        %v659 = vunpack.c.l.b16 %v325
        %v660 = vunpack.c.h.b16 %v325
        %v661 = vunpack.c.l.b16 %v326
        %v662 = vunpack.c.h.b16 %v326
        %v663 = vunpack.c.l.b16 %v327
        %v664 = vunpack.c.h.b16 %v327
        %v665 = vunpack.c.l.b16 %v328
        %v666 = vunpack.c.h.b16 %v328
        %v667 = vunpack.c.l.b16 %v329
        %v668 = vunpack.c.h.b16 %v329
        %v669 = vunpack.c.l.b16 %v330
        %v670 = vunpack.c.h.b16 %v330
        %v671 = vunpack.c.l.b16 %v331
        %v672 = vunpack.c.h.b16 %v331
        %v673 = vunpack.c.l.b16 %v332
        %v674 = vunpack.c.h.b16 %v332
        %v675 = vunpack.c.l.b16 %v333
        %v676 = vunpack.c.h.b16 %v333
        %v677 = vunpack.c.l.b16 %v334
        %v678 = vunpack.c.h.b16 %v334
        %v679 = vunpack.c.l.b16 %v335
        %v680 = vunpack.c.h.b16 %v335
        %v681 = vunpack.c.l.b16 %v336
        %v682 = vunpack.c.h.b16 %v336
        %v683 = vunpack.c.l.b16 %v337
        %v684 = vunpack.c.h.b16 %v337
        %v685 = vunpack.c.l.b16 %v338
        %v686 = vunpack.c.h.b16 %v338
        %v687 = vunpack.c.l.b16 %v339
        %v688 = vunpack.c.h.b16 %v339
        %v689 = vunpack.c.l.b16 %v340
        %v690 = vunpack.c.h.b16 %v340
        %v691 = vunpack.c.l.b16 %v341
        %v692 = vunpack.c.h.b16 %v341
        %v693 = vunpack.c.l.b16 %v342
        %v694 = vunpack.c.h.b16 %v342
        %v695 = vunpack.c.l.b16 %v343
        %v696 = vunpack.c.h.b16 %v343
        %v697 = vunpack.c.l.b16 %v344
        %v698 = vunpack.c.h.b16 %v344
        %v699 = vunpack.c.l.b16 %v345
        %v700 = vunpack.c.h.b16 %v345
        %v701 = vunpack.c.l.b16 %v346
        %v702 = vunpack.c.h.b16 %v346
        %v703 = vunpack.c.l.b16 %v347
        %v704 = vunpack.c.h.b16 %v347
        %v705 = vunpack.c.l.b16 %v348
        %v706 = vunpack.c.h.b16 %v348
        %v707 = vunpack.c.l.b16 %v349
        %v708 = vunpack.c.h.b16 %v349
        %v709 = vunpack.c.l.b16 %v350
        %v710 = vunpack.c.h.b16 %v350
        %v711 = vunpack.c.l.b16 %v351
        %v712 = vunpack.c.h.b16 %v351
        %v713 = vunpack.c.l.b16 %v352
        %v714 = vunpack.c.h.b16 %v352
        %v715 = vunpack.c.l.b16 %v353
        %v716 = vunpack.c.h.b16 %v353
        %v717 = vunpack.c.l.b16 %v354
        %v718 = vunpack.c.h.b16 %v354
        %v719 = vunpack.c.l.b16 %v355
        %v720 = vunpack.c.h.b16 %v355
        %v721 = vunpack.c.l.b16 %v356
        %v722 = vunpack.c.h.b16 %v356
        %v723 = vunpack.c.l.b16 %v357
        %v724 = vunpack.c.h.b16 %v357
        %v725 = vunpack.c.l.b16 %v358
        %v726 = vunpack.c.h.b16 %v358
        %v727 = vunpack.c.l.b16 %v359
        %v728 = vunpack.c.h.b16 %v359
        %v729 = vunpack.c.l.b16 %v360
        %v730 = vunpack.c.h.b16 %v360
        %v731 = vunpack.c.l.b16 %v361
        %v732 = vunpack.c.h.b16 %v361
        %v733 = vunpack.c.l.b16 %v362
        %v734 = vunpack.c.h.b16 %v362
        %v735 = vunpack.c.l.b16 %v363
        %v736 = vunpack.c.h.b16 %v363
        %v737 = vunpack.c.l.b16 %v364
        %v738 = vunpack.c.h.b16 %v364
        %v739 = vunpack.c.l.b16 %v365
        %v740 = vunpack.c.h.b16 %v365
        %v741 = vunpack.c.l.b16 %v366
        %v742 = vunpack.c.h.b16 %v366
        %v743 = vunpack.c.l.b16 %v367
        %v744 = vunpack.c.h.b16 %v367
        %v745 = vunpack.c.l.b16 %v368
        %v746 = vunpack.c.h.b16 %v368
        %v747 = vunpack.c.l.b16 %v369
        %v748 = vunpack.c.h.b16 %v369
        %v749 = vunpack.c.l.b16 %v370
        %v750 = vunpack.c.h.b16 %v370
        %v751 = vunpack.c.l.b16 %v371
        %v752 = vunpack.c.h.b16 %v371
        %v753 = vunpack.c.l.b16 %v372
        %v754 = vunpack.c.h.b16 %v372
        %v755 = vunpack.c.l.b16 %v373
        %v756 = vunpack.c.h.b16 %v373
        %v757 = vunpack.c.l.b16 %v374
        %v758 = vunpack.c.h.b16 %v374
        %v759 = vunpack.c.l.b16 %v375
        %v760 = vunpack.c.h.b16 %v375
        %v761 = vunpack.c.l.b16 %v376
        %v762 = vunpack.c.h.b16 %v376
        %v763 = vunpack.c.l.b16 %v377
        %v764 = vunpack.c.h.b16 %v377
        %v765 = vunpack.c.l.b16 %v378
        %v766 = vunpack.c.h.b16 %v378
        %v767 = vunpack.c.l.b16 %v379
        %v768 = vunpack.c.h.b16 %v379
        %v769 = vunpack.c.l.b16 %v380
        %v770 = vunpack.c.h.b16 %v380
        %v771 = vunpack.c.l.b16 %v381
        %v772 = vunpack.c.h.b16 %v381
        %v773 = vunpack.c.l.b16 %v382
        %v774 = vunpack.c.h.b16 %v382
        %v775 = vunpack.c.l.b16 %v383
        %v776 = vunpack.c.h.b16 %v383
        %v777 = vunpack.c.l.b16 %v384
        %v778 = vunpack.c.h.b16 %v384
        %v779 = vunpack.c.l.b16 %v385
        %v780 = vunpack.c.h.b16 %v385
        %v781 = vunpack.c.l.b16 %v386
        %v782 = vunpack.c.h.b16 %v386
        %v783 = vunpack.c.l.b16 %v387
        %v784 = vunpack.c.h.b16 %v387
        %v785 = vunpack.c.l.b16 %v388
        %v786 = vunpack.c.h.b16 %v388
        %v787 = vunpack.c.l.b16 %v389
        %v788 = vunpack.c.h.b16 %v389
        %v789 = vunpack.c.l.b16 %v390
        %v790 = vunpack.c.h.b16 %v390
        %v791 = vunpack.c.l.b16 %v391
        %v792 = vunpack.c.h.b16 %v391
        %v793 = vunpack.c.l.b16 %v392
        %v794 = vunpack.c.h.b16 %v392
        %v795 = vunpack.c.l.b16 %v393
        %v796 = vunpack.c.h.b16 %v393
        %v797 = vunpack.c.l.b16 %v394
        %v798 = vunpack.c.h.b16 %v394
        %v799 = vunpack.c.l.b16 %v395
        %v800 = vunpack.c.h.b16 %v395
        %v801 = vunpack.c.l.b16 %v396
        %v802 = vunpack.c.h.b16 %v396
        %v803 = vunpack.c.l.b16 %v397
        %v804 = vunpack.c.h.b16 %v397
        %v805 = vunpack.c.l.b16 %v398
        %v806 = vunpack.c.h.b16 %v398
        %v807 = vunpack.c.l.b16 %v399
        %v808 = vunpack.c.h.b16 %v399
        %v809 = vunpack.c.l.b16 %v400
        %v810 = vunpack.c.h.b16 %v400
        %v811 = vunpack.c.l.b16 %v401
        %v812 = vunpack.c.h.b16 %v401
        %v813 = vunpack.c.l.b16 %v402
        %v814 = vunpack.c.h.b16 %v402
        %v815 = vpack.c.b16 %v561, %v559
        %v816 = vpack.c.b16 %v562, %v560
        %v817 = vpack.c.b16 %v565, %v563
        %v818 = vpack.c.b16 %v566, %v564
        %v819 = vpack.c.b16 %v569, %v567
        %v820 = vpack.c.b16 %v570, %v568
        %v821 = vpack.c.b16 %v573, %v571
        %v822 = vpack.c.b16 %v574, %v572
        %v823 = vpack.c.b16 %v577, %v575
        %v824 = vpack.c.b16 %v578, %v576
        %v825 = vpack.c.b16 %v581, %v579
        %v826 = vpack.c.b16 %v582, %v580
        %v827 = vpack.c.b16 %v585, %v583
        %v828 = vpack.c.b16 %v586, %v584
        %v829 = vpack.c.b16 %v589, %v587
        %v830 = vpack.c.b16 %v590, %v588
        %v831 = vpack.c.b16 %v593, %v591
        %v832 = vpack.c.b16 %v594, %v592
        %v833 = vpack.c.b16 %v597, %v595
        %v834 = vpack.c.b16 %v598, %v596
        %v835 = vpack.c.b16 %v601, %v599
        %v836 = vpack.c.b16 %v602, %v600
        %v837 = vpack.c.b16 %v605, %v603
        %v838 = vpack.c.b16 %v606, %v604
        %v839 = vpack.c.b16 %v609, %v607
        %v840 = vpack.c.b16 %v610, %v608
        %v841 = vpack.c.b16 %v613, %v611
        %v842 = vpack.c.b16 %v614, %v612
        %v843 = vpack.c.b16 %v617, %v615
        %v844 = vpack.c.b16 %v618, %v616
        %v845 = vpack.c.b16 %v621, %v619
        %v846 = vpack.c.b16 %v622, %v620
        %v847 = vpack.c.b16 %v625, %v623
        %v848 = vpack.c.b16 %v626, %v624
        %v849 = vpack.c.b16 %v629, %v627
        %v850 = vpack.c.b16 %v630, %v628
        %v851 = vpack.c.b16 %v633, %v631
        %v852 = vpack.c.b16 %v634, %v632
        %v853 = vpack.c.b16 %v637, %v635
        %v854 = vpack.c.b16 %v638, %v636
        %v855 = vpack.c.b16 %v641, %v639
        %v856 = vpack.c.b16 %v642, %v640
        %v857 = vpack.c.b16 %v645, %v643
        %v858 = vpack.c.b16 %v646, %v644
        %v859 = vpack.c.b16 %v649, %v647
        %v860 = vpack.c.b16 %v650, %v648
        %v861 = vpack.c.b16 %v653, %v651
        %v862 = vpack.c.b16 %v654, %v652
        %v863 = vpack.c.b16 %v657, %v655
        %v864 = vpack.c.b16 %v658, %v656
        %v865 = vpack.c.b16 %v661, %v659
        %v866 = vpack.c.b16 %v662, %v660
        %v867 = vpack.c.b16 %v665, %v663
        %v868 = vpack.c.b16 %v666, %v664
        %v869 = vpack.c.b16 %v669, %v667
        %v870 = vpack.c.b16 %v670, %v668
        %v871 = vpack.c.b16 %v673, %v671
        %v872 = vpack.c.b16 %v674, %v672
        %v873 = vpack.c.b16 %v677, %v675
        %v874 = vpack.c.b16 %v678, %v676
        %v875 = vpack.c.b16 %v681, %v679
        %v876 = vpack.c.b16 %v682, %v680
        %v877 = vpack.c.b16 %v685, %v683
        %v878 = vpack.c.b16 %v686, %v684
        %v879 = vpack.c.b16 %v689, %v687
        %v880 = vpack.c.b16 %v690, %v688
        %v881 = vpack.c.b16 %v693, %v691
        %v882 = vpack.c.b16 %v694, %v692
        %v883 = vpack.c.b16 %v697, %v695
        %v884 = vpack.c.b16 %v698, %v696
        %v885 = vpack.c.b16 %v701, %v699
        %v886 = vpack.c.b16 %v702, %v700
        %v887 = vpack.c.b16 %v705, %v703
        %v888 = vpack.c.b16 %v706, %v704
        %v889 = vpack.c.b16 %v709, %v707
        %v890 = vpack.c.b16 %v710, %v708
        %v891 = vpack.c.b16 %v713, %v711
        %v892 = vpack.c.b16 %v714, %v712
        %v893 = vpack.c.b16 %v717, %v715
        %v894 = vpack.c.b16 %v718, %v716
        %v895 = vpack.c.b16 %v721, %v719
        %v896 = vpack.c.b16 %v722, %v720
        %v897 = vpack.c.b16 %v725, %v723
        %v898 = vpack.c.b16 %v726, %v724
        %v899 = vpack.c.b16 %v729, %v727
        %v900 = vpack.c.b16 %v730, %v728
        %v901 = vpack.c.b16 %v733, %v731
        %v902 = vpack.c.b16 %v734, %v732
        %v903 = vpack.c.b16 %v737, %v735
        %v904 = vpack.c.b16 %v738, %v736
        %v905 = vpack.c.b16 %v741, %v739
        %v906 = vpack.c.b16 %v742, %v740
        %v907 = vpack.c.b16 %v745, %v743
        %v908 = vpack.c.b16 %v746, %v744
        %v909 = vpack.c.b16 %v749, %v747
        %v910 = vpack.c.b16 %v750, %v748
        %v911 = vpack.c.b16 %v753, %v751
        %v912 = vpack.c.b16 %v754, %v752
        %v913 = vpack.c.b16 %v757, %v755
        %v914 = vpack.c.b16 %v758, %v756
        %v915 = vpack.c.b16 %v761, %v759
        %v916 = vpack.c.b16 %v762, %v760
        %v917 = vpack.c.b16 %v765, %v763
        %v918 = vpack.c.b16 %v766, %v764
        %v919 = vpack.c.b16 %v769, %v767
        %v920 = vpack.c.b16 %v770, %v768
        %v921 = vpack.c.b16 %v773, %v771
        %v922 = vpack.c.b16 %v774, %v772
        %v923 = vpack.c.b16 %v777, %v775
        %v924 = vpack.c.b16 %v778, %v776
        %v925 = vpack.c.b16 %v781, %v779
        %v926 = vpack.c.b16 %v782, %v780
        %v927 = vpack.c.b16 %v785, %v783
        %v928 = vpack.c.b16 %v786, %v784
        %v929 = vpack.c.b16 %v789, %v787
        %v930 = vpack.c.b16 %v790, %v788
        %v931 = vpack.c.b16 %v793, %v791
        %v932 = vpack.c.b16 %v794, %v792
        %v933 = vpack.c.b16 %v797, %v795
        %v934 = vpack.c.b16 %v798, %v796
        %v935 = vpack.c.b16 %v801, %v799
        %v936 = vpack.c.b16 %v802, %v800
        %v937 = vpack.c.b16 %v805, %v803
        %v938 = vpack.c.b16 %v806, %v804
        %v939 = vpack.c.b16 %v809, %v807
        %v940 = vpack.c.b16 %v810, %v808
        %v941 = vpack.c.b16 %v813, %v811
        %v942 = vpack.c.b16 %v814, %v812
        %1071 = vmatprep.subr.bf16.mxu0 %v816
        %1072 = vmatpush1.bf16.msra.mxu0 %v815
        %1073 = vmatprep.subr.bf16.mxu0 %v818
        %1074 = vmatpush1.bf16.msra.mxu0 %v817
        %1075 = vmatprep.subr.bf16.mxu0 %v820
        %1076 = vmatpush1.bf16.msra.mxu0 %v819
        %1077 = vmatprep.subr.bf16.mxu0 %v822
        %1078 = vmatpush1.bf16.msra.mxu0 %v821
        %1079 = vmatprep.subr.bf16.mxu0 %v824
        %1080 = vmatpush1.bf16.msra.mxu0 %v823
        %1081 = vmatprep.subr.bf16.mxu0 %v826
        %1082 = vmatpush1.bf16.msra.mxu0 %v825
        %1083 = vmatprep.subr.bf16.mxu0 %v828
        %1084 = vmatpush1.bf16.msra.mxu0 %v827
        %1085 = vmatprep.subr.bf16.mxu0 %v830
        %1086 = vmatpush1.bf16.msra.mxu0 %v829
        %1087 = vmatprep.subr.bf16.mxu0 %v832
        %1088 = vmatpush1.bf16.msra.mxu0 %v831
        %1089 = vmatprep.subr.bf16.mxu0 %v834
        %1090 = vmatpush1.bf16.msra.mxu0 %v833
        %1091 = vmatprep.subr.bf16.mxu0 %v836
        %1092 = vmatpush1.bf16.msra.mxu0 %v835
        %1093 = vmatprep.subr.bf16.mxu0 %v838
        %1094 = vmatpush1.bf16.msra.mxu0 %v837
        %1095 = vmatprep.subr.bf16.mxu0 %v840
        %1096 = vmatpush1.bf16.msra.mxu0 %v839
        %1097 = vmatprep.subr.bf16.mxu0 %v842
        %1098 = vmatpush1.bf16.msra.mxu0 %v841
        %1099 = vmatprep.subr.bf16.mxu0 %v844
        %1100 = vmatpush1.bf16.msra.mxu0 %v843
        %1101 = vmatprep.subr.bf16.mxu0 %v846
        %1102 = vmatpush1.bf16.msra.mxu0 %v845
        %1103 = vmatprep.mubr.bf16.mxu0 %v416
        %1104 = vmatmul.mubr.bf16.gmra.mrb[0].mxu0 %v415
        %v1105 = vpop.f32.mrb[0].mxu0
        %v1106 = vadd.f32 0.0, %v1105
        %v1107 = vpop.f32.mrb[0].mxu0
        %v1108 = vadd.f32 0.0, %v1107
        %v1109 = vpop.f32.mrb[0].mxu0
        %v1110 = vpop.f32.mrb[0].mxu0
        %1111 = vdwg.mxu0
        %1112 = vmatprep.subr.bf16.mxu0 %v848
        %1113 = vmatpush1.bf16.msra.mxu0 %v847
        %1114 = vmatprep.subr.bf16.mxu0 %v850
        %1115 = vmatpush1.bf16.msra.mxu0 %v849
        %1116 = vmatprep.subr.bf16.mxu0 %v852
        %1117 = vmatpush1.bf16.msra.mxu0 %v851
        %1118 = vmatprep.subr.bf16.mxu0 %v854
        %1119 = vmatpush1.bf16.msra.mxu0 %v853
        %1120 = vmatprep.subr.bf16.mxu0 %v856
        %1121 = vmatpush1.bf16.msra.mxu0 %v855
        %1122 = vmatprep.subr.bf16.mxu0 %v858
        %1123 = vmatpush1.bf16.msra.mxu0 %v857
        %1124 = vmatprep.subr.bf16.mxu0 %v860
        %1125 = vmatpush1.bf16.msra.mxu0 %v859
        %1126 = vmatprep.subr.bf16.mxu0 %v862
        %1127 = vmatpush1.bf16.msra.mxu0 %v861
        %1128 = vmatprep.subr.bf16.mxu0 %v864
        %1129 = vmatpush1.bf16.msra.mxu0 %v863
        %1130 = vmatprep.subr.bf16.mxu0 %v866
        %1131 = vmatpush1.bf16.msra.mxu0 %v865
        %1132 = vmatprep.subr.bf16.mxu0 %v868
        %1133 = vmatpush1.bf16.msra.mxu0 %v867
        %1134 = vmatprep.subr.bf16.mxu0 %v870
        %1135 = vmatpush1.bf16.msra.mxu0 %v869
        %1136 = vmatprep.subr.bf16.mxu0 %v872
        %1137 = vmatpush1.bf16.msra.mxu0 %v871
        %1138 = vmatprep.subr.bf16.mxu0 %v874
        %1139 = vmatpush1.bf16.msra.mxu0 %v873
        %1140 = vmatprep.subr.bf16.mxu0 %v876
        %1141 = vmatpush1.bf16.msra.mxu0 %v875
        %1142 = vmatprep.subr.bf16.mxu0 %v878
        %1143 = vmatpush1.bf16.msra.mxu0 %v877
        %1144 = vmatprep.mubr.bf16.mxu0 %v418
        %1145 = vmatmul.mubr.bf16.gmra.mrb[0].mxu0 %v417
        %v1146 = vpop.f32.mrb[0].mxu0
        %v1147 = vadd.f32 %v1106, %v1146
        %v1148 = vpop.f32.mrb[0].mxu0
        %v1149 = vadd.f32 %v1108, %v1148
        %v1150 = vpop.f32.mrb[0].mxu0
        %v1151 = vpop.f32.mrb[0].mxu0
        %1152 = vdwg.mxu0
        %1153 = vmatprep.subr.bf16.mxu0 %v880
        %1154 = vmatpush1.bf16.msra.mxu0 %v879
        %1155 = vmatprep.subr.bf16.mxu0 %v882
        %1156 = vmatpush1.bf16.msra.mxu0 %v881
        %1157 = vmatprep.subr.bf16.mxu0 %v884
        %1158 = vmatpush1.bf16.msra.mxu0 %v883
        %1159 = vmatprep.subr.bf16.mxu0 %v886
        %1160 = vmatpush1.bf16.msra.mxu0 %v885
        %1161 = vmatprep.subr.bf16.mxu0 %v888
        %1162 = vmatpush1.bf16.msra.mxu0 %v887
        %1163 = vmatprep.subr.bf16.mxu0 %v890
        %1164 = vmatpush1.bf16.msra.mxu0 %v889
        %1165 = vmatprep.subr.bf16.mxu0 %v892
        %1166 = vmatpush1.bf16.msra.mxu0 %v891
        %1167 = vmatprep.subr.bf16.mxu0 %v894
        %1168 = vmatpush1.bf16.msra.mxu0 %v893
        %1169 = vmatprep.subr.bf16.mxu0 %v896
        %1170 = vmatpush1.bf16.msra.mxu0 %v895
        %1171 = vmatprep.subr.bf16.mxu0 %v898
        %1172 = vmatpush1.bf16.msra.mxu0 %v897
        %1173 = vmatprep.subr.bf16.mxu0 %v900
        %1174 = vmatpush1.bf16.msra.mxu0 %v899
        %1175 = vmatprep.subr.bf16.mxu0 %v902
        %1176 = vmatpush1.bf16.msra.mxu0 %v901
        %1177 = vmatprep.subr.bf16.mxu0 %v904
        %1178 = vmatpush1.bf16.msra.mxu0 %v903
        %1179 = vmatprep.subr.bf16.mxu0 %v906
        %1180 = vmatpush1.bf16.msra.mxu0 %v905
        %1181 = vmatprep.subr.bf16.mxu0 %v908
        %1182 = vmatpush1.bf16.msra.mxu0 %v907
        %1183 = vmatprep.subr.bf16.mxu0 %v910
        %1184 = vmatpush1.bf16.msra.mxu0 %v909
        %1185 = vmatprep.mubr.bf16.mxu0 %v420
        %1186 = vmatmul.mubr.bf16.gmra.mrb[0].mxu0 %v419
        %v1187 = vpop.f32.mrb[0].mxu0
        %v1188 = vadd.f32 %v1147, %v1187
        %v1189 = vpop.f32.mrb[0].mxu0
        %v1190 = vadd.f32 %v1149, %v1189
        %v1191 = vpop.f32.mrb[0].mxu0
        %v1192 = vpop.f32.mrb[0].mxu0
        %1193 = vdwg.mxu0
        %1194 = vmatprep.subr.bf16.mxu0 %v912
        %1195 = vmatpush1.bf16.msra.mxu0 %v911
        %1196 = vmatprep.subr.bf16.mxu0 %v914
        %1197 = vmatpush1.bf16.msra.mxu0 %v913
        %1198 = vmatprep.subr.bf16.mxu0 %v916
        %1199 = vmatpush1.bf16.msra.mxu0 %v915
        %1200 = vmatprep.subr.bf16.mxu0 %v918
        %1201 = vmatpush1.bf16.msra.mxu0 %v917
        %1202 = vmatprep.subr.bf16.mxu0 %v920
        %1203 = vmatpush1.bf16.msra.mxu0 %v919
        %1204 = vmatprep.subr.bf16.mxu0 %v922
        %1205 = vmatpush1.bf16.msra.mxu0 %v921
        %1206 = vmatprep.subr.bf16.mxu0 %v924
        %1207 = vmatpush1.bf16.msra.mxu0 %v923
        %1208 = vmatprep.subr.bf16.mxu0 %v926
        %1209 = vmatpush1.bf16.msra.mxu0 %v925
        %1210 = vmatprep.subr.bf16.mxu0 %v928
        %1211 = vmatpush1.bf16.msra.mxu0 %v927
        %1212 = vmatprep.subr.bf16.mxu0 %v930
        %1213 = vmatpush1.bf16.msra.mxu0 %v929
        %1214 = vmatprep.subr.bf16.mxu0 %v932
        %1215 = vmatpush1.bf16.msra.mxu0 %v931
        %1216 = vmatprep.subr.bf16.mxu0 %v934
        %1217 = vmatpush1.bf16.msra.mxu0 %v933
        %1218 = vmatprep.subr.bf16.mxu0 %v936
        %1219 = vmatpush1.bf16.msra.mxu0 %v935
        %1220 = vmatprep.subr.bf16.mxu0 %v938
        %1221 = vmatpush1.bf16.msra.mxu0 %v937
        %1222 = vmatprep.subr.bf16.mxu0 %v940
        %1223 = vmatpush1.bf16.msra.mxu0 %v939
        %1224 = vmatprep.subr.bf16.mxu0 %v942
        %1225 = vmatpush1.bf16.msra.mxu0 %v941
        %1226 = vmatprep.mubr.bf16.mxu0 %v422
        %1227 = vmatmul.mubr.bf16.gmra.mrb[0].mxu0 %v421
        %v1228 = vpop.f32.mrb[0].mxu0
        %v1229 = vadd.f32 %v1188, %v1228
        %v1230 = vpop.f32.mrb[0].mxu0
        %v1231 = vadd.f32 %v1190, %v1230
        %v1232 = vpop.f32.mrb[0].mxu0
        %v1233 = vpop.f32.mrb[0].mxu0
        %1234 = vdwg.mxu0
        %v1235 = vadd.f32 %v269, %v1229
        %v1236 = vadd.f32 %v270, %v1231
        %1237 = vst [vmem:[#allocation2] sm:$0xff] %v1235
        %1238 = vst [vmem:[#allocation2 + $0x8] sm:$0xff] %v1236
        // Predicated region
        $region45: #{tpu_custom_call.1} parent=31 // pred_check
          %p1239 = pneg %p263
        $region46: #{tpu_custom_call.1} parent=31 // pred_check_branch
          %1241 = sbr.rel (%p1239) target = $region48
        $region47: #{tpu_custom_call.1} parent=31 // pred_region
          %v1242 = vld [vmem:[#allocation2] sm:$0xff]
          %v1243 = vld [vmem:[#allocation2 + $0x8] sm:$0xff]
          %v1244 = vld [vmem:[%s260] sm:$0x3]
          %v1246 = vlaneseq
          %v1247 = vshrl.u32 %v1246, 7
          %v1248 = vsub.s32 0, %v1247
          %v1249 = vrot.slane %v1244, %v1248
          %v1250 = vlaneseq
          %v1251 = vshrl.u32 %v1250, 7
          %v1252 = vsub.s32 1, %v1251
          %v1253 = vrot.slane %v1244, %v1252
          %v1256 = vadd.f32 %v1242, %v1249
          %v1257 = vadd.f32 %v1243, %v1253
          %v1258 = vpack.c.bf16 %v1256, %v1256
          %v1259 = vpack.c.bf16 %v1257, %v1257
          %v1262 = vunpack.c.l.b16 %v1258
          %v1263 = vunpack.c.l.b16 %v1259
          %v1264 = vpack.c.b16 %v1263, %v1262
          %1266 = vst [vmem:[%s253] sm:$0xff] %v1264
        $region48: #{tpu_custom_call.1} parent=31 // pred_fallthru
          _
        %s1267 = sand.u32 %s132, 1
        %s1268 = scalar_lea.sflag [#allocation5], %s1267
        %s1269 = sand.u32 %s132, 1
        %s1270 = smul.addr %s1269, 8
        %s1271 = scalar_lea.vmem [#allocation8], %s1270
        // Predicated region
        $region49: #{tpu_custom_call.1} parent=31 // pred_check
          %p1272 = pneg %p142
        $region50: #{tpu_custom_call.1} parent=31 // pred_check_branch
          %1274 = sbr.rel (%p1272) target = $region52
        $region51: #{tpu_custom_call.1} parent=31 // pred_region
          %s1275 = smul.u32 2, %s27
          %s1277 = ssub.s32 128, 128
          %1278 = vsyncadd %s1268, %s1277
          %s1279 = smul.addr %s26, 4
          %s1280 = sadd.s32 %s1275, %s1279
          %s1281 = smul.addr %s1280, 64
          %s1282 = scalar_lea.hbm %s3, %s1281
          %s1284 = sshll.u32 %s1271, 4
          %s1285 = int_to_ptr.vmem [resolvable:$true] %s1284
          %1287 = dma.vmem_to_hbm [thread:$0]  %s1285, 128, %s1282, %s1268
        $region52: #{tpu_custom_call.1} parent=31 // pred_fallthru
          _
      $region32: #{tpu_custom_call.1} parent=5 // pred_fallthru
        _
      %p1288 = scmp.le.s32.totalorder 2, %s16
      // Predicated region
      $region53: #{tpu_custom_call.1} parent=5 // pred_check
        %p1289 = pneg %p1288
      $region54: #{tpu_custom_call.1} parent=5 // pred_check_branch
        %1291 = sbr.rel (%p1289) target = $region56
      $region55: #{tpu_custom_call.1} parent=5 // pred_region
        %s1292 = ssub.s32 %s16, 2
        // Predicated region
        $region57: #{tpu_custom_call.1} parent=55 // pred_check
          %p1293 = pneg %p148
        $region58: #{tpu_custom_call.1} parent=55 // pred_check_branch
          %1295 = sbr.rel (%p1293) target = $region60
        $region59: #{tpu_custom_call.1} parent=55 // pred_region
          %s1296 = sand.u32 %s133, 1
          %s1297 = scalar_lea.sflag [#allocation5], %s1296
          %s1298 = sand.u32 %s133, 1
          %s1299 = smul.addr %s1298, 8
          %s1300 = scalar_lea.vmem [#allocation8], %s1299
          %1301 = dma.done %s1297, 128
        $region60: #{tpu_custom_call.1} parent=55 // pred_fallthru
          _
      $region56: #{tpu_custom_call.1} parent=5 // pred_fallthru
        _
    $region6: #{tpu_custom_call.1} parent=1 // loop_footer
      %s20 = sadd.s32 1, %s16
    $region7: #{tpu_custom_call.1} parent=1 // loop_footer_branch
      %15 = sbr.rel target = $region3
    $region8: #{tpu_custom_call.1} parent=1 // loop_exit
      _
    %1302 = vsyncpa [#allocation4], 1
    %s1303 = scalar_lea.sflag [#allocation4], 1
    %1304 = vsyncpa %s1303, 1
    %1305 = vsyncpa [#allocation7], 1
    %s1306 = scalar_lea.sflag [#allocation7], 1
    %1307 = vsyncpa %s1306, 1
    %1308 = vsyncpa [#allocation5], 1
    %s1309 = scalar_lea.sflag [#allocation5], 1
    %1310 = vsyncpa %s1309, 1

</llo_original>
